<compile_context>
chip_gen: v7x
topology: tpu7x:2x2x1
jax: 0.10.0
libtpu: 0.0.40
codegen_flags: <defaults>
</compile_context>

<pallas_src>
import jax
import jax.numpy as jnp
from jax.experimental import pallas as pl
from jax.experimental.pallas import tpu as pltpu

N_NODES = 34          # KarateClub: 34 nodes
N_FEATURES = 34       # KarateClub: x = identity(34)
N_CLASSES = 4         # KarateClub: 4 communities
H1, H2, H3 = 4, 4, 2  # GCN hidden sizes from the module

NP = 128              # padded node / contraction dim used by every matmul block
P_LANES = 128         # lane width of the slab and of the packed output
OUT_ROWS = 40         # output sublane dim: next multiple of 8 >= N_NODES

# ---- fused-operand slab layout: [P_ROWS, 128] bf16 --------------------------
ROW_A = 0             # rows   0..127 : A_hat                (data in [0:34, 0:34])
ROW_XW1 = 128         # rows 128..255 : X @ W1               (data in [0:34, 0:4 ])
ROW_W2 = 256          # rows 256..383 : W2                   (data in [0:4,  0:4 ])
ROW_W3 = 384          # rows 384..511 : W3                   (data in [0:4,  0:2 ])
ROW_WCP = 512         # rows 512..639 : packed classifier row k = [Wc[k,0:4] | 1@lane 4+k | 0...]
ROW_B1 = 640          # row 640 : b1 (lanes 0:4)
ROW_B2 = 641          # row 641 : b2 (lanes 0:4)
ROW_B3 = 642          # row 642 : b3 (lanes 0:2)
ROW_BC = 643          # row 643 : classifier bias (lanes 0:4; lanes 4:6 stay 0)
P_ROWS = 656          # multiple of 16 (bf16 sublane tile)


def gcn_kernel(p_ref, out_ref):
    # Static row slices of the single fused slab (free; all starts are tile-aligned).
    a = p_ref[ROW_A:ROW_A + NP, :]                  # [128,128] bf16 padded A_hat
    xw1 = p_ref[ROW_XW1:ROW_XW1 + NP, :]            # [128,128] bf16 padded X@W1
    w2 = p_ref[ROW_W2:ROW_W2 + NP, :]
    w3 = p_ref[ROW_W3:ROW_W3 + NP, :]
    wcp = p_ref[ROW_WCP:ROW_WCP + NP, :]
    b1 = p_ref[ROW_B1:ROW_B1 + 1, :]                # [1,128] bias rows, broadcast on add
    b2 = p_ref[ROW_B2:ROW_B2 + 1, :]
    b3 = p_ref[ROW_B3:ROW_B3 + 1, :]
    bc = p_ref[ROW_BC:ROW_BC + 1, :]

    # conv1: tanh(A_hat @ (X @ W1) + b1)   -- bf16 MXU operands, f32 accumulation.
    h = jnp.tanh(jnp.dot(a, xw1, preferred_element_type=jnp.float32) + b1)

    # conv2: tanh(A_hat @ (h @ W2) + b2)   -- both contractions as full-width MXU dots.
    hw = jnp.dot(h.astype(jnp.bfloat16), w2, preferred_element_type=jnp.float32)
    h = jnp.tanh(jnp.dot(a, hw.astype(jnp.bfloat16),
                         preferred_element_type=jnp.float32) + b2)

    # conv3: tanh(A_hat @ (h @ W3) + b3)
    hw = jnp.dot(h.astype(jnp.bfloat16), w3, preferred_element_type=jnp.float32)
    h = jnp.tanh(jnp.dot(a, hw.astype(jnp.bfloat16),
                         preferred_element_type=jnp.float32) + b3)

    # Classifier fused with output packing via the identity lanes of the Wc block:
    #   lanes 0:4 = h @ Wc + bc (logits), lanes 4:6 = h (2-d embedding), lanes 6: = 0.
    packed = jnp.dot(h.astype(jnp.bfloat16), wcp,
                     preferred_element_type=jnp.float32) + bc
    out_ref[...] = packed[:OUT_ROWS, :]             # unmasked lane-dense [40,128] store


@jax.jit
def gcn_forward_packed(operands):
    """Hot path: exactly one pallas_call, one input DMA, one output DMA.

    Returns a packed [40,128] f32 slab: [:, 0:4] = classifier logits,
    [:, 4:6] = 2-d embedding; only rows 0:34 are valid node rows.
    """
    return pl.pallas_call(
        gcn_kernel,
        out_shape=jax.ShapeDtypeStruct((OUT_ROWS, P_LANES), jnp.float32),
        in_specs=[pl.BlockSpec(memory_space=pltpu.MemorySpace.VMEM)],
        out_specs=pl.BlockSpec(memory_space=pltpu.MemorySpace.VMEM),
    )(operands)


def unpack_outputs(packed):
    """Off the latency path: split the packed slab into (logits, embedding)."""
    out = packed[:N_NODES, :N_CLASSES]              # [34, 4]
    h = packed[:N_NODES, N_CLASSES:N_CLASSES + H3]  # [34, 2]
    return out, h


def pack_operands(a_hat, xw1, b1, w2, b2, w3, b3, wc, bc):
    """Fuse the normalized adjacency and all parameters into one [656,128] bf16 slab.

    `xw1` is the conv1 feature transform X @ W1 (shape [N_NODES, H1]); for KarateClub
    X = I so it equals W1, but passing X @ W1 keeps the kernel correct for any X.
    """
    p = jnp.zeros((P_ROWS, P_LANES), jnp.float32)
    p = p.at[ROW_A:ROW_A + N_NODES, 0:N_NODES].set(a_hat)
    p = p.at[ROW_XW1:ROW_XW1 + N_NODES, 0:H1].set(xw1)
    p = p.at[ROW_W2:ROW_W2 + H1, 0:H2].set(w2)
    p = p.at[ROW_W3:ROW_W3 + H2, 0:H3].set(w3)
    # Packed classifier rows: lanes 0:4 hold Wc[k,:]; lane 4+k holds 1.0 so the same
    # dot also copies the 2-d embedding into lanes 4:6 of the output slab.
    p = p.at[ROW_WCP:ROW_WCP + H3, 0:N_CLASSES].set(wc)
    p = p.at[ROW_WCP + jnp.arange(H3), N_CLASSES + jnp.arange(H3)].set(1.0)
    p = p.at[ROW_B1, 0:H1].set(b1)
    p = p.at[ROW_B2, 0:H2].set(b2)
    p = p.at[ROW_B3, 0:H3].set(b3)
    p = p.at[ROW_BC, 0:N_CLASSES].set(bc)
    return p.astype(jnp.bfloat16)


def build_normalized_adjacency(edge_index, n):
    """Dense D^{-1/2}(A+I)D^{-1/2} from a [2, E] edge_index (plain-JAX glue, runs once)."""
    src, dst = edge_index[0], edge_index[1]
    adj = jnp.zeros((n, n), jnp.float32).at[src, dst].set(1.0)
    adj = jnp.maximum(adj, adj.T)                   # undirected
    idx = jnp.arange(n)
    adj = adj.at[idx, idx].set(1.0)                 # add self loops
    deg = adj.sum(axis=1)
    d_inv_sqrt = jax.lax.rsqrt(deg)
    return d_inv_sqrt[:, None] * adj * d_inv_sqrt[None, :]


def glorot(key, shape):
    fan_in, fan_out = shape
    limit = jnp.sqrt(6.0 / (fan_in + fan_out))
    return jax.random.uniform(key, shape, jnp.float32, -limit, limit)


def init_params(key):
    ks = jax.random.split(key, 8)
    w1 = glorot(ks[0], (N_FEATURES, H1))
    w2 = glorot(ks[1], (H1, H2))
    w3 = glorot(ks[2], (H2, H3))
    wc = glorot(ks[3], (H3, N_CLASSES))
    b1 = 0.1 * jax.random.normal(ks[4], (H1,), jnp.float32)
    b2 = 0.1 * jax.random.normal(ks[5], (H2,), jnp.float32)
    b3 = 0.1 * jax.random.normal(ks[6], (H3,), jnp.float32)
    bc = 0.1 * jax.random.normal(ks[7], (N_CLASSES,), jnp.float32)
    return (w1, b1, w2, b2, w3, b3, wc, bc)


def gcn_reference(a_hat, x, params):
    """Pure-JAX (f32) reference of the module's forward pass."""
    (w1, b1, w2, b2, w3, b3, wc, bc) = params
    h = jnp.tanh(a_hat @ (x @ w1) + b1)
    h = jnp.tanh(a_hat @ (h @ w2) + b2)
    h = jnp.tanh(a_hat @ (h @ w3) + b3)
    return h @ wc + bc, h


# Zachary's karate club graph (34 nodes, 78 undirected edges), 0-indexed.
KARATE_EDGES = [
    (0, 1), (0, 2), (0, 3), (0, 4), (0, 5), (0, 6), (0, 7), (0, 8), (0, 10),
    (0, 11), (0, 12), (0, 13), (0, 17), (0, 19), (0, 21), (0, 31),
    (1, 2), (1, 3), (1, 7), (1, 13), (1, 17), (1, 19), (1, 21), (1, 30),
    (2, 3), (2, 7), (2, 8), (2, 9), (2, 13), (2, 27), (2, 28), (2, 32),
    (3, 7), (3, 12), (3, 13),
    (4, 6), (4, 10),
    (5, 6), (5, 10), (5, 16),
    (6, 16),
    (8, 30), (8, 32), (8, 33),
    (9, 33),
    (13, 33),
    (14, 32), (14, 33),
    (15, 32), (15, 33),
    (18, 32), (18, 33),
    (19, 33),
    (20, 32), (20, 33),
    (22, 32), (22, 33),
    (23, 25), (23, 27), (23, 29), (23, 32), (23, 33),
    (24, 25), (24, 27), (24, 31),
    (25, 31),
    (26, 29), (26, 33),
    (27, 33),
    (28, 31), (28, 33),
    (29, 32), (29, 33),
    (30, 32), (30, 33),
    (31, 32), (31, 33),
    (32, 33),
]


if __name__ == "__main__":
    key = jax.random.PRNGKey(0)

    # KarateClub: one-hot identity node features and the real Zachary edge list.
    x = jnp.eye(N_NODES, N_FEATURES, dtype=jnp.float32)
    edge_index = jnp.asarray(KARATE_EDGES, dtype=jnp.int32).T      # [2, 78]
    a_hat = build_normalized_adjacency(edge_index, N_NODES)

    params = init_params(key)
    (w1, b1, w2, b2, w3, b3, wc, bc) = params
    xw1 = x @ w1   # conv1 feature transform (== w1 here since X = I); one-time glue
    operands = pack_operands(a_hat, xw1, b1, w2, b2, w3, b3, wc, bc)

    packed = gcn_forward_packed(operands)
    jax.block_until_ready(packed)
    out, h = unpack_outputs(packed)

    assert out.shape == (N_NODES, N_CLASSES) and h.shape == (N_NODES, H3)

    # Compare against the f32 reference; kernel uses bf16 MXU operands with f32
    # accumulation, so allow a slightly wider tolerance than pure-f32 would need.
    out_ref, h_ref = gcn_reference(a_hat, x, params)
    assert jnp.allclose(out, out_ref, atol=2e-2, rtol=2e-2), \
        float(jnp.abs(out - out_ref).max())
    assert jnp.allclose(h, h_ref, atol=2e-2, rtol=2e-2), \
        float(jnp.abs(h - h_ref).max())

    print("KERNEL_OK")
</pallas_src>

<mosaic_0001>
module attributes {stable_mosaic.version = 11 : i64} {
  func.func @gcn_kernel(%arg0: memref<656x128xbf16, #tpu.memory_space<vmem>>, %arg1: memref<40x128xf32, #tpu.memory_space<vmem>>) attributes {dimension_semantics = [], scalar_prefetch = 0 : i64, scratch_operands = 0 : i64, tpu.core_type = #tpu.core_type<tc>} {
    %c0 = arith.constant 0 : index
    %c0_0 = arith.constant 0 : index
    %0 = vector.load %arg0[%c0, %c0_0] : memref<656x128xbf16, #tpu.memory_space<vmem>>, vector<128x128xbf16>
    %c128 = arith.constant 128 : index
    %c0_1 = arith.constant 0 : index
    %1 = vector.load %arg0[%c128, %c0_1] : memref<656x128xbf16, #tpu.memory_space<vmem>>, vector<128x128xbf16>
    %c256 = arith.constant 256 : index
    %c0_2 = arith.constant 0 : index
    %2 = vector.load %arg0[%c256, %c0_2] : memref<656x128xbf16, #tpu.memory_space<vmem>>, vector<128x128xbf16>
    %c384 = arith.constant 384 : index
    %c0_3 = arith.constant 0 : index
    %3 = vector.load %arg0[%c384, %c0_3] : memref<656x128xbf16, #tpu.memory_space<vmem>>, vector<128x128xbf16>
    %c512 = arith.constant 512 : index
    %c0_4 = arith.constant 0 : index
    %4 = vector.load %arg0[%c512, %c0_4] : memref<656x128xbf16, #tpu.memory_space<vmem>>, vector<128x128xbf16>
    %c640 = arith.constant 640 : index
    %c0_5 = arith.constant 0 : index
    %5 = vector.load %arg0[%c640, %c0_5] : memref<656x128xbf16, #tpu.memory_space<vmem>>, vector<1x128xbf16>
    %c641 = arith.constant 641 : index
    %c0_6 = arith.constant 0 : index
    %6 = vector.load %arg0[%c641, %c0_6] : memref<656x128xbf16, #tpu.memory_space<vmem>>, vector<1x128xbf16>
    %c642 = arith.constant 642 : index
    %c0_7 = arith.constant 0 : index
    %7 = vector.load %arg0[%c642, %c0_7] : memref<656x128xbf16, #tpu.memory_space<vmem>>, vector<1x128xbf16>
    %c643 = arith.constant 643 : index
    %c0_8 = arith.constant 0 : index
    %8 = vector.load %arg0[%c643, %c0_8] : memref<656x128xbf16, #tpu.memory_space<vmem>>, vector<1x128xbf16>
    %cst = arith.constant dense<0.000000e+00> : vector<128x128xf32>
    %9 = tpu.matmul %0, %1, %cst {dimension_numbers = #tpu.dot_dimension_numbers<[1], [0], [0], [1], [0, 0, 1, 1], [], []>} : vector<128x128xbf16>, vector<128x128xbf16>, vector<128x128xf32> -> vector<128x128xf32>
    %10 = arith.extf %5 : vector<1x128xbf16> to vector<1x128xf32>
    %11 = vector.broadcast %10 : vector<1x128xf32> to vector<128x128xf32>
    %12 = arith.addf %9, %11 : vector<128x128xf32>
    %13 = math.tanh %12 : vector<128x128xf32>
    %14 = arith.truncf %13 : vector<128x128xf32> to vector<128x128xbf16>
    %cst_9 = arith.constant dense<0.000000e+00> : vector<128x128xf32>
    %15 = tpu.matmul %14, %2, %cst_9 {dimension_numbers = #tpu.dot_dimension_numbers<[1], [0], [0], [1], [0, 0, 1, 1], [], []>} : vector<128x128xbf16>, vector<128x128xbf16>, vector<128x128xf32> -> vector<128x128xf32>
    %16 = arith.truncf %15 : vector<128x128xf32> to vector<128x128xbf16>
    %cst_10 = arith.constant dense<0.000000e+00> : vector<128x128xf32>
    %17 = tpu.matmul %0, %16, %cst_10 {dimension_numbers = #tpu.dot_dimension_numbers<[1], [0], [0], [1], [0, 0, 1, 1], [], []>} : vector<128x128xbf16>, vector<128x128xbf16>, vector<128x128xf32> -> vector<128x128xf32>
    %18 = arith.extf %6 : vector<1x128xbf16> to vector<1x128xf32>
    %19 = vector.broadcast %18 : vector<1x128xf32> to vector<128x128xf32>
    %20 = arith.addf %17, %19 : vector<128x128xf32>
    %21 = math.tanh %20 : vector<128x128xf32>
    %22 = arith.truncf %21 : vector<128x128xf32> to vector<128x128xbf16>
    %cst_11 = arith.constant dense<0.000000e+00> : vector<128x128xf32>
    %23 = tpu.matmul %22, %3, %cst_11 {dimension_numbers = #tpu.dot_dimension_numbers<[1], [0], [0], [1], [0, 0, 1, 1], [], []>} : vector<128x128xbf16>, vector<128x128xbf16>, vector<128x128xf32> -> vector<128x128xf32>
    %24 = arith.truncf %23 : vector<128x128xf32> to vector<128x128xbf16>
    %cst_12 = arith.constant dense<0.000000e+00> : vector<128x128xf32>
    %25 = tpu.matmul %0, %24, %cst_12 {dimension_numbers = #tpu.dot_dimension_numbers<[1], [0], [0], [1], [0, 0, 1, 1], [], []>} : vector<128x128xbf16>, vector<128x128xbf16>, vector<128x128xf32> -> vector<128x128xf32>
    %26 = arith.extf %7 : vector<1x128xbf16> to vector<1x128xf32>
    %27 = vector.broadcast %26 : vector<1x128xf32> to vector<128x128xf32>
    %28 = arith.addf %25, %27 : vector<128x128xf32>
    %29 = math.tanh %28 : vector<128x128xf32>
    %30 = arith.truncf %29 : vector<128x128xf32> to vector<128x128xbf16>
    %cst_13 = arith.constant dense<0.000000e+00> : vector<128x128xf32>
    %31 = tpu.matmul %30, %4, %cst_13 {dimension_numbers = #tpu.dot_dimension_numbers<[1], [0], [0], [1], [0, 0, 1, 1], [], []>} : vector<128x128xbf16>, vector<128x128xbf16>, vector<128x128xf32> -> vector<128x128xf32>
    %32 = arith.extf %8 : vector<1x128xbf16> to vector<1x128xf32>
    %33 = vector.broadcast %32 : vector<1x128xf32> to vector<128x128xf32>
    %34 = arith.addf %31, %33 : vector<128x128xf32>
    %35 = vector.extract_strided_slice %34 {offsets = [0, 0], sizes = [40, 128], strides = [1, 1]} : vector<128x128xf32> to vector<40x128xf32>
    %c0_14 = arith.constant 0 : index
    %c0_15 = arith.constant 0 : index
    %36 = vector.load %arg1[%c0_14, %c0_15] : memref<40x128xf32, #tpu.memory_space<vmem>>, vector<40x128xf32>
    tpu.vector_store %arg1[%c0_14, %c0_15], %35 {strides = array<i32>} : memref<40x128xf32, #tpu.memory_space<vmem>>, vector<40x128xf32>,
    return
  }
}

</mosaic_0001>

<llo_original>
// kernel: gcn_forward_packed.1
$region0: #{gcn_forward_packed.1}
  #allocation0 [shape = 'u32[]', space=smem, size = 0x4, offset = 0x4, fixed_abs, tag = 'smem constant byte address 0x4 - core index']
  #allocation1 [shape = 'u32[144,128]{1,0:T(1,128)}', space=vmem, size = 0x12000, scoped, tag = 'internal scratch']
  %s0 = inlined_call_operand.hbm [shape: bf16[656,128], index: 0, kind: input, shape index: {}]
  %s1 = inlined_call_operand.hbm [shape: f32[40,128], index: 1, kind: output, shape index: {}]
  %s2 = sld [smem:[#allocation0]]
  $region18: #{gcn_forward_packed.1} parent=0
    _
  %s4 = ssub.s32 1, %s2
  %s5 = scalar_select 0, %s4, %s2
  $region1: #{gcn_forward_packed.1} parent=0
    #allocation2 [shape = 'u8[167936]{0}', space=vmem, size = 0x29000, scoped, tag = 'input window, operand 0, single buffered']
    #allocation3 [shape = 's32[1]{0}', space=sflag, size = 0x4, scoped, tag = 'scoped memory for gcn_forward_packed.1']
    #allocation4 [shape = 's32[1]{0}', space=sflag, size = 0x4, scoped, tag = 'scoped memory for gcn_forward_packed.1']
    #allocation5 [shape = 'u8[20480]{0}', space=vmem, size = 0x5000, scoped, tag = 'output window, operand 0, single buffered']
    %6 = vsyncpa [#allocation3], 0
    %7 = vsyncpa [#allocation4], 0
    // Predicated region
    $region2: #{gcn_forward_packed.1} parent=1 // pred_check
      _
    $region3: #{gcn_forward_packed.1} parent=1 // pred_check_branch
      %9 = sbr.rel (0) target = $region5
    $region4: #{gcn_forward_packed.1} parent=1 // pred_region
      %s11 = ssub.s32 5248, 5248
      %12 = vsyncadd [#allocation3], %s11
      %s13 = sshll.u32 [#allocation2], 4
      %s14 = int_to_ptr.vmem [resolvable:$true] %s13
      %19 = dma.hbm_to_vmem [thread:$0]  %s0, 5248, %s14, [#allocation3], 64, 64, 4
    $region5: #{gcn_forward_packed.1} parent=1 // pred_fallthru
      _
    // Predicated region
    $region6: #{gcn_forward_packed.1} parent=1 // pred_check
      _
    $region7: #{gcn_forward_packed.1} parent=1 // pred_check_branch
      %21 = sbr.rel (0) target = $region9
    $region8: #{gcn_forward_packed.1} parent=1 // pred_region
      %22 = dma.done [#allocation3], 5248
    $region9: #{gcn_forward_packed.1} parent=1 // pred_fallthru
      _
    %v24 = vld [vmem:[#allocation2] sm:$0xf]
    %v25 = vld [vmem:[#allocation2 + $0x4] sm:$0xf]
    %v26 = vld [vmem:[#allocation2 + $0x8] sm:$0xf]
    %v27 = vld [vmem:[#allocation2 + $0xc] sm:$0xf]
    %v28 = vld [vmem:[#allocation2 + $0x10] sm:$0xf]
    %v29 = vld [vmem:[#allocation2 + $0x14] sm:$0xf]
    %v30 = vld [vmem:[#allocation2 + $0x18] sm:$0xf]
    %v31 = vld [vmem:[#allocation2 + $0x1c] sm:$0xf]
    %v32 = vld [vmem:[#allocation2 + $0x20] sm:$0xf]
    %v33 = vld [vmem:[#allocation2 + $0x24] sm:$0xf]
    %v34 = vld [vmem:[#allocation2 + $0x28] sm:$0xf]
    %v35 = vld [vmem:[#allocation2 + $0x2c] sm:$0xf]
    %v36 = vld [vmem:[#allocation2 + $0x30] sm:$0xf]
    %v37 = vld [vmem:[#allocation2 + $0x34] sm:$0xf]
    %v38 = vld [vmem:[#allocation2 + $0x38] sm:$0xf]
    %v39 = vld [vmem:[#allocation2 + $0x3c] sm:$0xf]
    %v40 = vld [vmem:[#allocation2 + $0x40] sm:$0xf]
    %v41 = vld [vmem:[#allocation2 + $0x44] sm:$0xf]
    %v42 = vld [vmem:[#allocation2 + $0x48] sm:$0xf]
    %v43 = vld [vmem:[#allocation2 + $0x4c] sm:$0xf]
    %v44 = vld [vmem:[#allocation2 + $0x50] sm:$0xf]
    %v45 = vld [vmem:[#allocation2 + $0x54] sm:$0xf]
    %v46 = vld [vmem:[#allocation2 + $0x58] sm:$0xf]
    %v47 = vld [vmem:[#allocation2 + $0x5c] sm:$0xf]
    %v48 = vld [vmem:[#allocation2 + $0x60] sm:$0xf]
    %v49 = vld [vmem:[#allocation2 + $0x64] sm:$0xf]
    %v50 = vld [vmem:[#allocation2 + $0x68] sm:$0xf]
    %v51 = vld [vmem:[#allocation2 + $0x6c] sm:$0xf]
    %v52 = vld [vmem:[#allocation2 + $0x70] sm:$0xf]
    %v53 = vld [vmem:[#allocation2 + $0x74] sm:$0xf]
    %v54 = vld [vmem:[#allocation2 + $0x78] sm:$0xf]
    %v55 = vld [vmem:[#allocation2 + $0x7c] sm:$0xf]
    %v56 = vld [vmem:[#allocation2 + $0x80] sm:$0xf]
    %v57 = vld [vmem:[#allocation2 + $0x84] sm:$0xf]
    %v58 = vld [vmem:[#allocation2 + $0x88] sm:$0xf]
    %v59 = vld [vmem:[#allocation2 + $0x8c] sm:$0xf]
    %v60 = vld [vmem:[#allocation2 + $0x90] sm:$0xf]
    %v61 = vld [vmem:[#allocation2 + $0x94] sm:$0xf]
    %v62 = vld [vmem:[#allocation2 + $0x98] sm:$0xf]
    %v63 = vld [vmem:[#allocation2 + $0x9c] sm:$0xf]
    %v64 = vld [vmem:[#allocation2 + $0xa0] sm:$0xf]
    %v65 = vld [vmem:[#allocation2 + $0xa4] sm:$0xf]
    %v66 = vld [vmem:[#allocation2 + $0xa8] sm:$0xf]
    %v67 = vld [vmem:[#allocation2 + $0xac] sm:$0xf]
    %v68 = vld [vmem:[#allocation2 + $0xb0] sm:$0xf]
    %v69 = vld [vmem:[#allocation2 + $0xb4] sm:$0xf]
    %v70 = vld [vmem:[#allocation2 + $0xb8] sm:$0xf]
    %v71 = vld [vmem:[#allocation2 + $0xbc] sm:$0xf]
    %v72 = vld [vmem:[#allocation2 + $0xc0] sm:$0xf]
    %v73 = vld [vmem:[#allocation2 + $0xc4] sm:$0xf]
    %v74 = vld [vmem:[#allocation2 + $0xc8] sm:$0xf]
    %v75 = vld [vmem:[#allocation2 + $0xcc] sm:$0xf]
    %v76 = vld [vmem:[#allocation2 + $0xd0] sm:$0xf]
    %v77 = vld [vmem:[#allocation2 + $0xd4] sm:$0xf]
    %v78 = vld [vmem:[#allocation2 + $0xd8] sm:$0xf]
    %v79 = vld [vmem:[#allocation2 + $0xdc] sm:$0xf]
    %v80 = vld [vmem:[#allocation2 + $0xe0] sm:$0xf]
    %v81 = vld [vmem:[#allocation2 + $0xe4] sm:$0xf]
    %v82 = vld [vmem:[#allocation2 + $0xe8] sm:$0xf]
    %v83 = vld [vmem:[#allocation2 + $0xec] sm:$0xf]
    %v84 = vld [vmem:[#allocation2 + $0xf0] sm:$0xf]
    %v85 = vld [vmem:[#allocation2 + $0xf4] sm:$0xf]
    %v86 = vld [vmem:[#allocation2 + $0xf8] sm:$0xf]
    %v87 = vld [vmem:[#allocation2 + $0xfc] sm:$0xf]
    %v88 = vld [vmem:[#allocation2 + $0x100] sm:$0xf]
    %v89 = vld [vmem:[#allocation2 + $0x104] sm:$0xf]
    %v90 = vld [vmem:[#allocation2 + $0x108] sm:$0xf]
    %v91 = vld [vmem:[#allocation2 + $0x10c] sm:$0xf]
    %v92 = vld [vmem:[#allocation2 + $0x110] sm:$0xf]
    %v93 = vld [vmem:[#allocation2 + $0x114] sm:$0xf]
    %v94 = vld [vmem:[#allocation2 + $0x118] sm:$0xf]
    %v95 = vld [vmem:[#allocation2 + $0x11c] sm:$0xf]
    %v96 = vld [vmem:[#allocation2 + $0x120] sm:$0xf]
    %v97 = vld [vmem:[#allocation2 + $0x124] sm:$0xf]
    %v98 = vld [vmem:[#allocation2 + $0x128] sm:$0xf]
    %v99 = vld [vmem:[#allocation2 + $0x12c] sm:$0xf]
    %v100 = vld [vmem:[#allocation2 + $0x130] sm:$0xf]
    %v101 = vld [vmem:[#allocation2 + $0x134] sm:$0xf]
    %v102 = vld [vmem:[#allocation2 + $0x138] sm:$0xf]
    %v103 = vld [vmem:[#allocation2 + $0x13c] sm:$0xf]
    %v104 = vld [vmem:[#allocation2 + $0x140] sm:$0x1]
    %v105 = vld [vmem:[#allocation2 + $0x140] sm:$0x2]
    %v106 = vunpack.c.l.bf16 %v104
    %v107 = vlaneseq
    %v108 = vshrl.u32 %v107, 7
    %v109 = vsub.s32 0, %v108
    %v110 = vrot.slane %v106, %v109
    %v127 = vunpack.c.l.b16 %v24
    %v128 = vunpack.c.l.b16 %v25
    %v129 = vunpack.c.l.b16 %v26
    %v130 = vunpack.c.l.b16 %v27
    %v131 = vunpack.c.l.b16 %v28
    %v132 = vunpack.c.l.b16 %v29
    %v133 = vunpack.c.l.b16 %v30
    %v134 = vunpack.c.l.b16 %v31
    %v135 = vunpack.c.l.b16 %v32
    %v136 = vunpack.c.l.b16 %v33
    %v137 = vunpack.c.l.b16 %v34
    %v138 = vunpack.c.l.b16 %v35
    %v139 = vunpack.c.l.b16 %v36
    %v140 = vunpack.c.l.b16 %v37
    %v141 = vunpack.c.l.b16 %v38
    %v142 = vunpack.c.l.b16 %v39
    %v143 = vpack.c.b16 %v128, %v127
    %v144 = vpack.c.b16 %v130, %v129
    %v145 = vpack.c.b16 %v132, %v131
    %v146 = vpack.c.b16 %v134, %v133
    %v147 = vpack.c.b16 %v136, %v135
    %v148 = vpack.c.b16 %v138, %v137
    %v149 = vpack.c.b16 %v140, %v139
    %v150 = vpack.c.b16 %v142, %v141
    %v175 = vunpack.c.l.b16 %v40
    %v176 = vunpack.c.l.b16 %v41
    %v177 = vunpack.c.l.b16 %v42
    %v178 = vunpack.c.l.b16 %v43
    %v179 = vunpack.c.l.b16 %v44
    %v180 = vunpack.c.l.b16 %v45
    %v181 = vunpack.c.l.b16 %v46
    %v182 = vunpack.c.l.b16 %v47
    %v183 = vunpack.c.l.b16 %v48
    %v184 = vunpack.c.l.b16 %v49
    %v185 = vunpack.c.l.b16 %v50
    %v186 = vunpack.c.l.b16 %v51
    %v187 = vunpack.c.l.b16 %v52
    %v188 = vunpack.c.l.b16 %v53
    %v189 = vunpack.c.l.b16 %v54
    %v190 = vunpack.c.l.b16 %v55
    %v191 = vpack.c.b16 %v176, %v175
    %v192 = vpack.c.b16 %v178, %v177
    %v193 = vpack.c.b16 %v180, %v179
    %v194 = vpack.c.b16 %v182, %v181
    %v195 = vpack.c.b16 %v184, %v183
    %v196 = vpack.c.b16 %v186, %v185
    %v197 = vpack.c.b16 %v188, %v187
    %v198 = vpack.c.b16 %v190, %v189
    %207 = vmatprep.subr.bf16.mxu0 0
    %208 = vmatpush1.bf16.msra.mxu0 %v191
    %209 = vmatprep.subr.bf16.mxu0 0
    %210 = vmatpush1.bf16.msra.mxu0 %v192
    %211 = vmatprep.subr.bf16.mxu0 0
    %212 = vmatpush1.bf16.msra.mxu0 %v193
    %213 = vmatprep.subr.bf16.mxu0 0
    %214 = vmatpush1.bf16.msra.mxu0 %v194
    %215 = vmatprep.subr.bf16.mxu0 0
    %216 = vmatpush1.bf16.msra.mxu0 %v195
    %217 = vmatprep.subr.bf16.mxu0 0
    %218 = vmatpush1.bf16.msra.mxu0 %v196
    %219 = vmatprep.subr.bf16.mxu0 0
    %220 = vmatpush1.bf16.msra.mxu0 %v197
    %221 = vmatprep.subr.bf16.mxu0 0
    %222 = vmatpush1.bf16.msra.mxu0 %v198
    %223 = vmatprep.subr.bf16.mxu0 0
    %224 = vmatpush1.bf16.msra.mxu0 0
    %225 = vmatprep.subr.bf16.mxu0 0
    %226 = vmatpush1.bf16.msra.mxu0 0
    %227 = vmatprep.subr.bf16.mxu0 0
    %228 = vmatpush1.bf16.msra.mxu0 0
    %229 = vmatprep.subr.bf16.mxu0 0
    %230 = vmatpush1.bf16.msra.mxu0 0
    %231 = vmatprep.subr.bf16.mxu0 0
    %232 = vmatpush1.bf16.msra.mxu0 0
    %233 = vmatprep.subr.bf16.mxu0 0
    %234 = vmatpush1.bf16.msra.mxu0 0
    %235 = vmatprep.subr.bf16.mxu0 0
    %236 = vmatpush1.bf16.msra.mxu0 0
    %237 = vmatprep.subr.bf16.mxu0 0
    %238 = vmatpush1.bf16.msra.mxu0 0
    %239 = vmatprep.mubr.bf16.mxu0 0
    %240 = vmatmul.mubr.bf16.gmra.mrb[0].mxu0 %v143
    %v241 = vpop.f32.mrb[0].mxu0
    %v242 = vadd.f32 %v110, %v241
    %v243 = vpop.f32.mrb[0].mxu0
    %v244 = vpop.f32.mrb[0].mxu0
    %v245 = vadd.f32 %v110, %v244
    %v246 = vpop.f32.mrb[0].mxu0
    %247 = vmatprep.mubr.bf16.mxu0 0
    %248 = vmatmul.mubr.bf16.gmra.mrb[0].mxu0 %v144
    %v249 = vpop.f32.mrb[0].mxu0
    %v250 = vadd.f32 %v110, %v249
    %v251 = vpop.f32.mrb[0].mxu0
    %v252 = vpop.f32.mrb[0].mxu0
    %v253 = vadd.f32 %v110, %v252
    %v254 = vpop.f32.mrb[0].mxu0
    %255 = vmatprep.mubr.bf16.mxu0 0
    %256 = vmatmul.mubr.bf16.gmra.mrb[0].mxu0 %v145
    %v257 = vpop.f32.mrb[0].mxu0
    %v258 = vadd.f32 %v110, %v257
    %v259 = vpop.f32.mrb[0].mxu0
    %v260 = vpop.f32.mrb[0].mxu0
    %v261 = vadd.f32 %v110, %v260
    %v262 = vpop.f32.mrb[0].mxu0
    %263 = vmatprep.mubr.bf16.mxu0 0
    %264 = vmatmul.mubr.bf16.gmra.mrb[0].mxu0 %v146
    %v265 = vpop.f32.mrb[0].mxu0
    %v266 = vadd.f32 %v110, %v265
    %v267 = vpop.f32.mrb[0].mxu0
    %v268 = vpop.f32.mrb[0].mxu0
    %v269 = vadd.f32 %v110, %v268
    %v270 = vpop.f32.mrb[0].mxu0
    %271 = vmatprep.mubr.bf16.mxu0 0
    %272 = vmatmul.mubr.bf16.gmra.mrb[0].mxu0 %v147
    %v273 = vpop.f32.mrb[0].mxu0
    %v274 = vadd.f32 %v110, %v273
    %v275 = vpop.f32.mrb[0].mxu0
    %v276 = vpop.f32.mrb[0].mxu0
    %v277 = vadd.f32 %v110, %v276
    %v278 = vpop.f32.mrb[0].mxu0
    %279 = vmatprep.mubr.bf16.mxu0 0
    %280 = vmatmul.mubr.bf16.gmra.mrb[0].mxu0 %v148
    %v281 = vpop.f32.mrb[0].mxu0
    %v282 = vadd.f32 %v110, %v281
    %v283 = vpop.f32.mrb[0].mxu0
    %v284 = vpop.f32.mrb[0].mxu0
    %v285 = vadd.f32 %v110, %v284
    %v286 = vpop.f32.mrb[0].mxu0
    %287 = vmatprep.mubr.bf16.mxu0 0
    %288 = vmatmul.mubr.bf16.gmra.mrb[0].mxu0 %v149
    %v289 = vpop.f32.mrb[0].mxu0
    %v290 = vadd.f32 %v110, %v289
    %v291 = vpop.f32.mrb[0].mxu0
    %v292 = vpop.f32.mrb[0].mxu0
    %v293 = vadd.f32 %v110, %v292
    %v294 = vpop.f32.mrb[0].mxu0
    %295 = vmatprep.mubr.bf16.mxu0 0
    %296 = vmatmul.mubr.bf16.gmra.mrb[0].mxu0 %v150
    %v297 = vpop.f32.mrb[0].mxu0
    %v298 = vadd.f32 %v110, %v297
    %v299 = vpop.f32.mrb[0].mxu0
    %v300 = vpop.f32.mrb[0].mxu0
    %v301 = vadd.f32 %v110, %v300
    %v302 = vpop.f32.mrb[0].mxu0
    %303 = vdwg.mxu0
    %v304 = vtanh.pop %v242
    %v305 = vtanh.pop %v245
    %v306 = vtanh.pop %v250
    %v307 = vtanh.pop %v253
    %v308 = vtanh.pop %v258
    %v309 = vtanh.pop %v261
    %v310 = vtanh.pop %v266
    %v311 = vtanh.pop %v269
    %v312 = vtanh.pop %v274
    %v313 = vtanh.pop %v277
    %v314 = vtanh.pop %v282
    %v315 = vtanh.pop %v285
    %v316 = vtanh.pop %v290
    %v317 = vtanh.pop %v293
    %v318 = vtanh.pop %v298
    %v319 = vtanh.pop %v301
    %v320 = vpack.c.bf16 %v305, %v304
    %v321 = vpack.c.bf16 %v307, %v306
    %v322 = vpack.c.bf16 %v309, %v308
    %v323 = vpack.c.bf16 %v311, %v310
    %v324 = vpack.c.bf16 %v313, %v312
    %v325 = vpack.c.bf16 %v315, %v314
    %v326 = vpack.c.bf16 %v317, %v316
    %v327 = vpack.c.bf16 %v319, %v318
    %v344 = vunpack.c.l.b16 %v56
    %v345 = vunpack.c.l.b16 %v57
    %v346 = vunpack.c.l.b16 %v58
    %v347 = vunpack.c.l.b16 %v59
    %v348 = vunpack.c.l.b16 %v60
    %v349 = vunpack.c.l.b16 %v61
    %v350 = vunpack.c.l.b16 %v62
    %v351 = vunpack.c.l.b16 %v63
    %v352 = vunpack.c.l.b16 %v64
    %v353 = vunpack.c.l.b16 %v65
    %v354 = vunpack.c.l.b16 %v66
    %v355 = vunpack.c.l.b16 %v67
    %v356 = vunpack.c.l.b16 %v68
    %v357 = vunpack.c.l.b16 %v69
    %v358 = vunpack.c.l.b16 %v70
    %v359 = vunpack.c.l.b16 %v71
    %v360 = vpack.c.b16 %v345, %v344
    %v361 = vpack.c.b16 %v347, %v346
    %v362 = vpack.c.b16 %v349, %v348
    %v363 = vpack.c.b16 %v351, %v350
    %v364 = vpack.c.b16 %v353, %v352
    %v365 = vpack.c.b16 %v355, %v354
    %v366 = vpack.c.b16 %v357, %v356
    %v367 = vpack.c.b16 %v359, %v358
    %376 = vmatprep.subr.bf16.mxu0 0
    %377 = vmatpush1.bf16.msra.mxu0 %v360
    %378 = vmatprep.subr.bf16.mxu0 0
    %379 = vmatpush1.bf16.msra.mxu0 %v361
    %380 = vmatprep.subr.bf16.mxu0 0
    %381 = vmatpush1.bf16.msra.mxu0 %v362
    %382 = vmatprep.subr.bf16.mxu0 0
    %383 = vmatpush1.bf16.msra.mxu0 %v363
    %384 = vmatprep.subr.bf16.mxu0 0
    %385 = vmatpush1.bf16.msra.mxu0 %v364
    %386 = vmatprep.subr.bf16.mxu0 0
    %387 = vmatpush1.bf16.msra.mxu0 %v365
    %388 = vmatprep.subr.bf16.mxu0 0
    %389 = vmatpush1.bf16.msra.mxu0 %v366
    %390 = vmatprep.subr.bf16.mxu0 0
    %391 = vmatpush1.bf16.msra.mxu0 %v367
    %392 = vmatprep.subr.bf16.mxu0 0
    %393 = vmatpush1.bf16.msra.mxu0 0
    %394 = vmatprep.subr.bf16.mxu0 0
    %395 = vmatpush1.bf16.msra.mxu0 0
    %396 = vmatprep.subr.bf16.mxu0 0
    %397 = vmatpush1.bf16.msra.mxu0 0
    %398 = vmatprep.subr.bf16.mxu0 0
    %399 = vmatpush1.bf16.msra.mxu0 0
    %400 = vmatprep.subr.bf16.mxu0 0
    %401 = vmatpush1.bf16.msra.mxu0 0
    %402 = vmatprep.subr.bf16.mxu0 0
    %403 = vmatpush1.bf16.msra.mxu0 0
    %404 = vmatprep.subr.bf16.mxu0 0
    %405 = vmatpush1.bf16.msra.mxu0 0
    %406 = vmatprep.subr.bf16.mxu0 0
    %407 = vmatpush1.bf16.msra.mxu0 0
    %408 = vmatprep.mubr.bf16.mxu0 0
    %409 = vmatmul.mubr.bf16.gmra.mrb[0].mxu0 %v320
    %v410 = vpop.f32.mrb[0].mxu0
    %v411 = vadd.f32 0.0, %v410
    %v412 = vpop.f32.mrb[0].mxu0
    %v413 = vpop.f32.mrb[0].mxu0
    %v414 = vadd.f32 0.0, %v413
    %v415 = vpop.f32.mrb[0].mxu0
    %416 = vmatprep.mubr.bf16.mxu0 0
    %417 = vmatmul.mubr.bf16.gmra.mrb[0].mxu0 %v321
    %v418 = vpop.f32.mrb[0].mxu0
    %v419 = vadd.f32 0.0, %v418
    %v420 = vpop.f32.mrb[0].mxu0
    %v421 = vpop.f32.mrb[0].mxu0
    %v422 = vadd.f32 0.0, %v421
    %v423 = vpop.f32.mrb[0].mxu0
    %424 = vmatprep.mubr.bf16.mxu0 0
    %425 = vmatmul.mubr.bf16.gmra.mrb[0].mxu0 %v322
    %v426 = vpop.f32.mrb[0].mxu0
    %v427 = vadd.f32 0.0, %v426
    %v428 = vpop.f32.mrb[0].mxu0
    %v429 = vpop.f32.mrb[0].mxu0
    %v430 = vadd.f32 0.0, %v429
    %v431 = vpop.f32.mrb[0].mxu0
    %432 = vmatprep.mubr.bf16.mxu0 0
    %433 = vmatmul.mubr.bf16.gmra.mrb[0].mxu0 %v323
    %v434 = vpop.f32.mrb[0].mxu0
    %v435 = vadd.f32 0.0, %v434
    %v436 = vpop.f32.mrb[0].mxu0
    %v437 = vpop.f32.mrb[0].mxu0
    %v438 = vadd.f32 0.0, %v437
    %v439 = vpop.f32.mrb[0].mxu0
    %440 = vmatprep.mubr.bf16.mxu0 0
    %441 = vmatmul.mubr.bf16.gmra.mrb[0].mxu0 %v324
    %v442 = vpop.f32.mrb[0].mxu0
    %v443 = vadd.f32 0.0, %v442
    %v444 = vpop.f32.mrb[0].mxu0
    %v445 = vpop.f32.mrb[0].mxu0
    %v446 = vadd.f32 0.0, %v445
    %v447 = vpop.f32.mrb[0].mxu0
    %448 = vmatprep.mubr.bf16.mxu0 0
    %449 = vmatmul.mubr.bf16.gmra.mrb[0].mxu0 %v325
    %v450 = vpop.f32.mrb[0].mxu0
    %v451 = vadd.f32 0.0, %v450
    %v452 = vpop.f32.mrb[0].mxu0
    %v453 = vpop.f32.mrb[0].mxu0
    %v454 = vadd.f32 0.0, %v453
    %v455 = vpop.f32.mrb[0].mxu0
    %456 = vmatprep.mubr.bf16.mxu0 0
    %457 = vmatmul.mubr.bf16.gmra.mrb[0].mxu0 %v326
    %v458 = vpop.f32.mrb[0].mxu0
    %v459 = vadd.f32 0.0, %v458
    %v460 = vpop.f32.mrb[0].mxu0
    %v461 = vpop.f32.mrb[0].mxu0
    %v462 = vadd.f32 0.0, %v461
    %v463 = vpop.f32.mrb[0].mxu0
    %464 = vmatprep.mubr.bf16.mxu0 0
    %465 = vmatmul.mubr.bf16.gmra.mrb[0].mxu0 %v327
    %v466 = vpop.f32.mrb[0].mxu0
    %v467 = vadd.f32 0.0, %v466
    %v468 = vpop.f32.mrb[0].mxu0
    %v469 = vpop.f32.mrb[0].mxu0
    %v470 = vadd.f32 0.0, %v469
    %v471 = vpop.f32.mrb[0].mxu0
    %472 = vdwg.mxu0
    %v473 = vpack.c.bf16 %v414, %v411
    %v474 = vpack.c.bf16 %v422, %v419
    %v475 = vpack.c.bf16 %v430, %v427
    %v476 = vpack.c.bf16 %v438, %v435
    %v477 = vpack.c.bf16 %v446, %v443
    %v478 = vpack.c.bf16 %v454, %v451
    %v479 = vpack.c.bf16 %v462, %v459
    %v480 = vpack.c.bf16 %v470, %v467
    %v481 = vlaneseq
    %v482 = vshrl.u32 %v481, 7
    %v483 = vsub.s32 1, %v482
    %v484 = vrot.slane %v106, %v483
    %485 = vmatprep.subr.bf16.mxu0 0
    %486 = vmatpush1.bf16.msra.mxu0 %v473
    %487 = vmatprep.subr.bf16.mxu0 0
    %488 = vmatpush1.bf16.msra.mxu0 %v474
    %489 = vmatprep.subr.bf16.mxu0 0
    %490 = vmatpush1.bf16.msra.mxu0 %v475
    %491 = vmatprep.subr.bf16.mxu0 0
    %492 = vmatpush1.bf16.msra.mxu0 %v476
    %493 = vmatprep.subr.bf16.mxu0 0
    %494 = vmatpush1.bf16.msra.mxu0 %v477
    %495 = vmatprep.subr.bf16.mxu0 0
    %496 = vmatpush1.bf16.msra.mxu0 %v478
    %497 = vmatprep.subr.bf16.mxu0 0
    %498 = vmatpush1.bf16.msra.mxu0 %v479
    %499 = vmatprep.subr.bf16.mxu0 0
    %500 = vmatpush1.bf16.msra.mxu0 %v480
    %501 = vmatprep.subr.bf16.mxu0 0
    %502 = vmatpush1.bf16.msra.mxu0 0
    %503 = vmatprep.subr.bf16.mxu0 0
    %504 = vmatpush1.bf16.msra.mxu0 0
    %505 = vmatprep.subr.bf16.mxu0 0
    %506 = vmatpush1.bf16.msra.mxu0 0
    %507 = vmatprep.subr.bf16.mxu0 0
    %508 = vmatpush1.bf16.msra.mxu0 0
    %509 = vmatprep.subr.bf16.mxu0 0
    %510 = vmatpush1.bf16.msra.mxu0 0
    %511 = vmatprep.subr.bf16.mxu0 0
    %512 = vmatpush1.bf16.msra.mxu0 0
    %513 = vmatprep.subr.bf16.mxu0 0
    %514 = vmatpush1.bf16.msra.mxu0 0
    %515 = vmatprep.subr.bf16.mxu0 0
    %516 = vmatpush1.bf16.msra.mxu0 0
    %517 = vmatprep.mubr.bf16.mxu0 0
    %518 = vmatmul.mubr.bf16.gmra.mrb[0].mxu0 %v143
    %v519 = vpop.f32.mrb[0].mxu0
    %v520 = vadd.f32 %v484, %v519
    %v521 = vpop.f32.mrb[0].mxu0
    %v522 = vpop.f32.mrb[0].mxu0
    %v523 = vadd.f32 %v484, %v522
    %v524 = vpop.f32.mrb[0].mxu0
    %525 = vmatprep.mubr.bf16.mxu0 0
    %526 = vmatmul.mubr.bf16.gmra.mrb[0].mxu0 %v144
    %v527 = vpop.f32.mrb[0].mxu0
    %v528 = vadd.f32 %v484, %v527
    %v529 = vpop.f32.mrb[0].mxu0
    %v530 = vpop.f32.mrb[0].mxu0
    %v531 = vadd.f32 %v484, %v530
    %v532 = vpop.f32.mrb[0].mxu0
    %533 = vmatprep.mubr.bf16.mxu0 0
    %534 = vmatmul.mubr.bf16.gmra.mrb[0].mxu0 %v145
    %v535 = vpop.f32.mrb[0].mxu0
    %v536 = vadd.f32 %v484, %v535
    %v537 = vpop.f32.mrb[0].mxu0
    %v538 = vpop.f32.mrb[0].mxu0
    %v539 = vadd.f32 %v484, %v538
    %v540 = vpop.f32.mrb[0].mxu0
    %541 = vmatprep.mubr.bf16.mxu0 0
    %542 = vmatmul.mubr.bf16.gmra.mrb[0].mxu0 %v146
    %v543 = vpop.f32.mrb[0].mxu0
    %v544 = vadd.f32 %v484, %v543
    %v545 = vpop.f32.mrb[0].mxu0
    %v546 = vpop.f32.mrb[0].mxu0
    %v547 = vadd.f32 %v484, %v546
    %v548 = vpop.f32.mrb[0].mxu0
    %549 = vmatprep.mubr.bf16.mxu0 0
    %550 = vmatmul.mubr.bf16.gmra.mrb[0].mxu0 %v147
    %v551 = vpop.f32.mrb[0].mxu0
    %v552 = vadd.f32 %v484, %v551
    %v553 = vpop.f32.mrb[0].mxu0
    %v554 = vpop.f32.mrb[0].mxu0
    %v555 = vadd.f32 %v484, %v554
    %v556 = vpop.f32.mrb[0].mxu0
    %557 = vmatprep.mubr.bf16.mxu0 0
    %558 = vmatmul.mubr.bf16.gmra.mrb[0].mxu0 %v148
    %v559 = vpop.f32.mrb[0].mxu0
    %v560 = vadd.f32 %v484, %v559
    %v561 = vpop.f32.mrb[0].mxu0
    %v562 = vpop.f32.mrb[0].mxu0
    %v563 = vadd.f32 %v484, %v562
    %v564 = vpop.f32.mrb[0].mxu0
    %565 = vmatprep.mubr.bf16.mxu0 0
    %566 = vmatmul.mubr.bf16.gmra.mrb[0].mxu0 %v149
    %v567 = vpop.f32.mrb[0].mxu0
    %v568 = vadd.f32 %v484, %v567
    %v569 = vpop.f32.mrb[0].mxu0
    %v570 = vpop.f32.mrb[0].mxu0
    %v571 = vadd.f32 %v484, %v570
    %v572 = vpop.f32.mrb[0].mxu0
    %573 = vmatprep.mubr.bf16.mxu0 0
    %574 = vmatmul.mubr.bf16.gmra.mrb[0].mxu0 %v150
    %v575 = vpop.f32.mrb[0].mxu0
    %v576 = vadd.f32 %v484, %v575
    %v577 = vpop.f32.mrb[0].mxu0
    %v578 = vpop.f32.mrb[0].mxu0
    %v579 = vadd.f32 %v484, %v578
    %v580 = vpop.f32.mrb[0].mxu0
    %581 = vdwg.mxu0
    %v582 = vtanh.pop %v520
    %v583 = vtanh.pop %v523
    %v584 = vtanh.pop %v528
    %v585 = vtanh.pop %v531
    %v586 = vtanh.pop %v536
    %v587 = vtanh.pop %v539
    %v588 = vtanh.pop %v544
    %v589 = vtanh.pop %v547
    %v590 = vtanh.pop %v552
    %v591 = vtanh.pop %v555
    %v592 = vtanh.pop %v560
    %v593 = vtanh.pop %v563
    %v594 = vtanh.pop %v568
    %v595 = vtanh.pop %v571
    %v596 = vtanh.pop %v576
    %v597 = vtanh.pop %v579
    %v598 = vpack.c.bf16 %v583, %v582
    %v599 = vpack.c.bf16 %v585, %v584
    %v600 = vpack.c.bf16 %v587, %v586
    %v601 = vpack.c.bf16 %v589, %v588
    %v602 = vpack.c.bf16 %v591, %v590
    %v603 = vpack.c.bf16 %v593, %v592
    %v604 = vpack.c.bf16 %v595, %v594
    %v605 = vpack.c.bf16 %v597, %v596
    %v622 = vunpack.c.l.b16 %v72
    %v623 = vunpack.c.l.b16 %v73
    %v624 = vunpack.c.l.b16 %v74
    %v625 = vunpack.c.l.b16 %v75
    %v626 = vunpack.c.l.b16 %v76
    %v627 = vunpack.c.l.b16 %v77
    %v628 = vunpack.c.l.b16 %v78
    %v629 = vunpack.c.l.b16 %v79
    %v630 = vunpack.c.l.b16 %v80
    %v631 = vunpack.c.l.b16 %v81
    %v632 = vunpack.c.l.b16 %v82
    %v633 = vunpack.c.l.b16 %v83
    %v634 = vunpack.c.l.b16 %v84
    %v635 = vunpack.c.l.b16 %v85
    %v636 = vunpack.c.l.b16 %v86
    %v637 = vunpack.c.l.b16 %v87
    %v638 = vpack.c.b16 %v623, %v622
    %v639 = vpack.c.b16 %v625, %v624
    %v640 = vpack.c.b16 %v627, %v626
    %v641 = vpack.c.b16 %v629, %v628
    %v642 = vpack.c.b16 %v631, %v630
    %v643 = vpack.c.b16 %v633, %v632
    %v644 = vpack.c.b16 %v635, %v634
    %v645 = vpack.c.b16 %v637, %v636
    %654 = vmatprep.subr.bf16.mxu0 0
    %655 = vmatpush1.bf16.msra.mxu0 %v638
    %656 = vmatprep.subr.bf16.mxu0 0
    %657 = vmatpush1.bf16.msra.mxu0 %v639
    %658 = vmatprep.subr.bf16.mxu0 0
    %659 = vmatpush1.bf16.msra.mxu0 %v640
    %660 = vmatprep.subr.bf16.mxu0 0
    %661 = vmatpush1.bf16.msra.mxu0 %v641
    %662 = vmatprep.subr.bf16.mxu0 0
    %663 = vmatpush1.bf16.msra.mxu0 %v642
    %664 = vmatprep.subr.bf16.mxu0 0
    %665 = vmatpush1.bf16.msra.mxu0 %v643
    %666 = vmatprep.subr.bf16.mxu0 0
    %667 = vmatpush1.bf16.msra.mxu0 %v644
    %668 = vmatprep.subr.bf16.mxu0 0
    %669 = vmatpush1.bf16.msra.mxu0 %v645
    %670 = vmatprep.subr.bf16.mxu0 0
    %671 = vmatpush1.bf16.msra.mxu0 0
    %672 = vmatprep.subr.bf16.mxu0 0
    %673 = vmatpush1.bf16.msra.mxu0 0
    %674 = vmatprep.subr.bf16.mxu0 0
    %675 = vmatpush1.bf16.msra.mxu0 0
    %676 = vmatprep.subr.bf16.mxu0 0
    %677 = vmatpush1.bf16.msra.mxu0 0
    %678 = vmatprep.subr.bf16.mxu0 0
    %679 = vmatpush1.bf16.msra.mxu0 0
    %680 = vmatprep.subr.bf16.mxu0 0
    %681 = vmatpush1.bf16.msra.mxu0 0
    %682 = vmatprep.subr.bf16.mxu0 0
    %683 = vmatpush1.bf16.msra.mxu0 0
    %684 = vmatprep.subr.bf16.mxu0 0
    %685 = vmatpush1.bf16.msra.mxu0 0
    %686 = vmatprep.mubr.bf16.mxu0 0
    %687 = vmatmul.mubr.bf16.gmra.mrb[0].mxu0 %v598
    %v688 = vpop.f32.mrb[0].mxu0
    %v689 = vadd.f32 0.0, %v688
    %v690 = vpop.f32.mrb[0].mxu0
    %v691 = vpop.f32.mrb[0].mxu0
    %v692 = vadd.f32 0.0, %v691
    %v693 = vpop.f32.mrb[0].mxu0
    %694 = vmatprep.mubr.bf16.mxu0 0
    %695 = vmatmul.mubr.bf16.gmra.mrb[0].mxu0 %v599
    %v696 = vpop.f32.mrb[0].mxu0
    %v697 = vadd.f32 0.0, %v696
    %v698 = vpop.f32.mrb[0].mxu0
    %v699 = vpop.f32.mrb[0].mxu0
    %v700 = vadd.f32 0.0, %v699
    %v701 = vpop.f32.mrb[0].mxu0
    %702 = vmatprep.mubr.bf16.mxu0 0
    %703 = vmatmul.mubr.bf16.gmra.mrb[0].mxu0 %v600
    %v704 = vpop.f32.mrb[0].mxu0
    %v705 = vadd.f32 0.0, %v704
    %v706 = vpop.f32.mrb[0].mxu0
    %v707 = vpop.f32.mrb[0].mxu0
    %v708 = vadd.f32 0.0, %v707
    %v709 = vpop.f32.mrb[0].mxu0
    %710 = vmatprep.mubr.bf16.mxu0 0
    %711 = vmatmul.mubr.bf16.gmra.mrb[0].mxu0 %v601
    %v712 = vpop.f32.mrb[0].mxu0
    %v713 = vadd.f32 0.0, %v712
    %v714 = vpop.f32.mrb[0].mxu0
    %v715 = vpop.f32.mrb[0].mxu0
    %v716 = vadd.f32 0.0, %v715
    %v717 = vpop.f32.mrb[0].mxu0
    %718 = vmatprep.mubr.bf16.mxu0 0
    %719 = vmatmul.mubr.bf16.gmra.mrb[0].mxu0 %v602
    %v720 = vpop.f32.mrb[0].mxu0
    %v721 = vadd.f32 0.0, %v720
    %v722 = vpop.f32.mrb[0].mxu0
    %v723 = vpop.f32.mrb[0].mxu0
    %v724 = vadd.f32 0.0, %v723
    %v725 = vpop.f32.mrb[0].mxu0
    %726 = vmatprep.mubr.bf16.mxu0 0
    %727 = vmatmul.mubr.bf16.gmra.mrb[0].mxu0 %v603
    %v728 = vpop.f32.mrb[0].mxu0
    %v729 = vadd.f32 0.0, %v728
    %v730 = vpop.f32.mrb[0].mxu0
    %v731 = vpop.f32.mrb[0].mxu0
    %v732 = vadd.f32 0.0, %v731
    %v733 = vpop.f32.mrb[0].mxu0
    %734 = vmatprep.mubr.bf16.mxu0 0
    %735 = vmatmul.mubr.bf16.gmra.mrb[0].mxu0 %v604
    %v736 = vpop.f32.mrb[0].mxu0
    %v737 = vadd.f32 0.0, %v736
    %v738 = vpop.f32.mrb[0].mxu0
    %v739 = vpop.f32.mrb[0].mxu0
    %v740 = vadd.f32 0.0, %v739
    %v741 = vpop.f32.mrb[0].mxu0
    %742 = vmatprep.mubr.bf16.mxu0 0
    %743 = vmatmul.mubr.bf16.gmra.mrb[0].mxu0 %v605
    %v744 = vpop.f32.mrb[0].mxu0
    %v745 = vadd.f32 0.0, %v744
    %v746 = vpop.f32.mrb[0].mxu0
    %v747 = vpop.f32.mrb[0].mxu0
    %v748 = vadd.f32 0.0, %v747
    %v749 = vpop.f32.mrb[0].mxu0
    %750 = vdwg.mxu0
    %v751 = vpack.c.bf16 %v692, %v689
    %v752 = vpack.c.bf16 %v700, %v697
    %v753 = vpack.c.bf16 %v708, %v705
    %v754 = vpack.c.bf16 %v716, %v713
    %v755 = vpack.c.bf16 %v724, %v721
    %v756 = vpack.c.bf16 %v732, %v729
    %v757 = vpack.c.bf16 %v740, %v737
    %v758 = vpack.c.bf16 %v748, %v745
    %v759 = vunpack.c.l.bf16 %v105
    %v760 = vlaneseq
    %v761 = vshrl.u32 %v760, 7
    %v762 = vsub.s32 2, %v761
    %v763 = vrot.slane %v759, %v762
    %764 = vmatprep.subr.bf16.mxu0 0
    %765 = vmatpush1.bf16.msra.mxu0 %v751
    %766 = vmatprep.subr.bf16.mxu0 0
    %767 = vmatpush1.bf16.msra.mxu0 %v752
    %768 = vmatprep.subr.bf16.mxu0 0
    %769 = vmatpush1.bf16.msra.mxu0 %v753
    %770 = vmatprep.subr.bf16.mxu0 0
    %771 = vmatpush1.bf16.msra.mxu0 %v754
    %772 = vmatprep.subr.bf16.mxu0 0
    %773 = vmatpush1.bf16.msra.mxu0 %v755
    %774 = vmatprep.subr.bf16.mxu0 0
    %775 = vmatpush1.bf16.msra.mxu0 %v756
    %776 = vmatprep.subr.bf16.mxu0 0
    %777 = vmatpush1.bf16.msra.mxu0 %v757
    %778 = vmatprep.subr.bf16.mxu0 0
    %779 = vmatpush1.bf16.msra.mxu0 %v758
    %780 = vmatprep.subr.bf16.mxu0 0
    %781 = vmatpush1.bf16.msra.mxu0 0
    %782 = vmatprep.subr.bf16.mxu0 0
    %783 = vmatpush1.bf16.msra.mxu0 0
    %784 = vmatprep.subr.bf16.mxu0 0
    %785 = vmatpush1.bf16.msra.mxu0 0
    %786 = vmatprep.subr.bf16.mxu0 0
    %787 = vmatpush1.bf16.msra.mxu0 0
    %788 = vmatprep.subr.bf16.mxu0 0
    %789 = vmatpush1.bf16.msra.mxu0 0
    %790 = vmatprep.subr.bf16.mxu0 0
    %791 = vmatpush1.bf16.msra.mxu0 0
    %792 = vmatprep.subr.bf16.mxu0 0
    %793 = vmatpush1.bf16.msra.mxu0 0
    %794 = vmatprep.subr.bf16.mxu0 0
    %795 = vmatpush1.bf16.msra.mxu0 0
    %796 = vmatprep.mubr.bf16.mxu0 0
    %797 = vmatmul.mubr.bf16.gmra.mrb[0].mxu0 %v143
    %v798 = vpop.f32.mrb[0].mxu0
    %v799 = vadd.f32 %v763, %v798
    %v800 = vpop.f32.mrb[0].mxu0
    %v801 = vpop.f32.mrb[0].mxu0
    %v802 = vadd.f32 %v763, %v801
    %v803 = vpop.f32.mrb[0].mxu0
    %804 = vmatprep.mubr.bf16.mxu0 0
    %805 = vmatmul.mubr.bf16.gmra.mrb[0].mxu0 %v144
    %v806 = vpop.f32.mrb[0].mxu0
    %v807 = vadd.f32 %v763, %v806
    %v808 = vpop.f32.mrb[0].mxu0
    %v809 = vpop.f32.mrb[0].mxu0
    %v810 = vadd.f32 %v763, %v809
    %v811 = vpop.f32.mrb[0].mxu0
    %812 = vmatprep.mubr.bf16.mxu0 0
    %813 = vmatmul.mubr.bf16.gmra.mrb[0].mxu0 %v145
    %v814 = vpop.f32.mrb[0].mxu0
    %v815 = vadd.f32 %v763, %v814
    %v816 = vpop.f32.mrb[0].mxu0
    %v817 = vpop.f32.mrb[0].mxu0
    %v818 = vadd.f32 %v763, %v817
    %v819 = vpop.f32.mrb[0].mxu0
    %820 = vmatprep.mubr.bf16.mxu0 0
    %821 = vmatmul.mubr.bf16.gmra.mrb[0].mxu0 %v146
    %v822 = vpop.f32.mrb[0].mxu0
    %v823 = vadd.f32 %v763, %v822
    %v824 = vpop.f32.mrb[0].mxu0
    %v825 = vpop.f32.mrb[0].mxu0
    %v826 = vadd.f32 %v763, %v825
    %v827 = vpop.f32.mrb[0].mxu0
    %828 = vmatprep.mubr.bf16.mxu0 0
    %829 = vmatmul.mubr.bf16.gmra.mrb[0].mxu0 %v147
    %v830 = vpop.f32.mrb[0].mxu0
    %v831 = vadd.f32 %v763, %v830
    %v832 = vpop.f32.mrb[0].mxu0
    %v833 = vpop.f32.mrb[0].mxu0
    %v834 = vadd.f32 %v763, %v833
    %v835 = vpop.f32.mrb[0].mxu0
    %836 = vmatprep.mubr.bf16.mxu0 0
    %837 = vmatmul.mubr.bf16.gmra.mrb[0].mxu0 %v148
    %v838 = vpop.f32.mrb[0].mxu0
    %v839 = vadd.f32 %v763, %v838
    %v840 = vpop.f32.mrb[0].mxu0
    %v841 = vpop.f32.mrb[0].mxu0
    %v842 = vadd.f32 %v763, %v841
    %v843 = vpop.f32.mrb[0].mxu0
    %844 = vmatprep.mubr.bf16.mxu0 0
    %845 = vmatmul.mubr.bf16.gmra.mrb[0].mxu0 %v149
    %v846 = vpop.f32.mrb[0].mxu0
    %v847 = vadd.f32 %v763, %v846
    %v848 = vpop.f32.mrb[0].mxu0
    %v849 = vpop.f32.mrb[0].mxu0
    %v850 = vadd.f32 %v763, %v849
    %v851 = vpop.f32.mrb[0].mxu0
    %852 = vmatprep.mubr.bf16.mxu0 0
    %853 = vmatmul.mubr.bf16.gmra.mrb[0].mxu0 %v150
    %v854 = vpop.f32.mrb[0].mxu0
    %v855 = vadd.f32 %v763, %v854
    %v856 = vpop.f32.mrb[0].mxu0
    %v857 = vpop.f32.mrb[0].mxu0
    %v858 = vadd.f32 %v763, %v857
    %v859 = vpop.f32.mrb[0].mxu0
    %860 = vdwg.mxu0
    %v861 = vtanh.pop %v799
    %v862 = vtanh.pop %v802
    %v863 = vtanh.pop %v807
    %v864 = vtanh.pop %v810
    %v865 = vtanh.pop %v815
    %v866 = vtanh.pop %v818
    %v867 = vtanh.pop %v823
    %v868 = vtanh.pop %v826
    %v869 = vtanh.pop %v831
    %v870 = vtanh.pop %v834
    %v871 = vtanh.pop %v839
    %v872 = vtanh.pop %v842
    %v873 = vtanh.pop %v847
    %v874 = vtanh.pop %v850
    %v875 = vtanh.pop %v855
    %v876 = vtanh.pop %v858
    %v877 = vpack.c.bf16 %v862, %v861
    %v878 = vpack.c.bf16 %v864, %v863
    %v879 = vpack.c.bf16 %v866, %v865
    %v880 = vpack.c.bf16 %v868, %v867
    %v881 = vpack.c.bf16 %v870, %v869
    %v882 = vpack.c.bf16 %v872, %v871
    %v883 = vpack.c.bf16 %v874, %v873
    %v884 = vpack.c.bf16 %v876, %v875
    %v885 = vlaneseq
    %v886 = vshrl.u32 %v885, 7
    %v887 = vsub.s32 3, %v886
    %v888 = vrot.slane %v759, %v887
    %v905 = vunpack.c.l.b16 %v88
    %v906 = vunpack.c.l.b16 %v89
    %v907 = vunpack.c.l.b16 %v90
    %v908 = vunpack.c.l.b16 %v91
    %v909 = vunpack.c.l.b16 %v92
    %v910 = vunpack.c.l.b16 %v93
    %v911 = vunpack.c.l.b16 %v94
    %v912 = vunpack.c.l.b16 %v95
    %v913 = vunpack.c.l.b16 %v96
    %v914 = vunpack.c.l.b16 %v97
    %v915 = vunpack.c.l.b16 %v98
    %v916 = vunpack.c.l.b16 %v99
    %v917 = vunpack.c.l.b16 %v100
    %v918 = vunpack.c.l.b16 %v101
    %v919 = vunpack.c.l.b16 %v102
    %v920 = vunpack.c.l.b16 %v103
    %v921 = vpack.c.b16 %v906, %v905
    %v922 = vpack.c.b16 %v908, %v907
    %v923 = vpack.c.b16 %v910, %v909
    %v924 = vpack.c.b16 %v912, %v911
    %v925 = vpack.c.b16 %v914, %v913
    %v926 = vpack.c.b16 %v916, %v915
    %v927 = vpack.c.b16 %v918, %v917
    %v928 = vpack.c.b16 %v920, %v919
    %937 = vmatprep.subr.bf16.mxu0 0
    %938 = vmatpush1.bf16.msra.mxu0 %v921
    %939 = vmatprep.subr.bf16.mxu0 0
    %940 = vmatpush1.bf16.msra.mxu0 %v922
    %941 = vmatprep.subr.bf16.mxu0 0
    %942 = vmatpush1.bf16.msra.mxu0 %v923
    %943 = vmatprep.subr.bf16.mxu0 0
    %944 = vmatpush1.bf16.msra.mxu0 %v924
    %945 = vmatprep.subr.bf16.mxu0 0
    %946 = vmatpush1.bf16.msra.mxu0 %v925
    %947 = vmatprep.subr.bf16.mxu0 0
    %948 = vmatpush1.bf16.msra.mxu0 %v926
    %949 = vmatprep.subr.bf16.mxu0 0
    %950 = vmatpush1.bf16.msra.mxu0 %v927
    %951 = vmatprep.subr.bf16.mxu0 0
    %952 = vmatpush1.bf16.msra.mxu0 %v928
    %953 = vmatprep.subr.bf16.mxu0 0
    %954 = vmatpush1.bf16.msra.mxu0 0
    %955 = vmatprep.subr.bf16.mxu0 0
    %956 = vmatpush1.bf16.msra.mxu0 0
    %957 = vmatprep.subr.bf16.mxu0 0
    %958 = vmatpush1.bf16.msra.mxu0 0
    %959 = vmatprep.subr.bf16.mxu0 0
    %960 = vmatpush1.bf16.msra.mxu0 0
    %961 = vmatprep.subr.bf16.mxu0 0
    %962 = vmatpush1.bf16.msra.mxu0 0
    %963 = vmatprep.subr.bf16.mxu0 0
    %964 = vmatpush1.bf16.msra.mxu0 0
    %965 = vmatprep.subr.bf16.mxu0 0
    %966 = vmatpush1.bf16.msra.mxu0 0
    %967 = vmatprep.subr.bf16.mxu0 0
    %968 = vmatpush1.bf16.msra.mxu0 0
    %969 = vmatprep.mubr.bf16.mxu0 0
    %970 = vmatmul.mubr.bf16.gmra.mrb[0].mxu0 %v877
    %v971 = vpop.f32.mrb[0].mxu0
    %v972 = vadd.f32 %v888, %v971
    %v973 = vpop.f32.mrb[0].mxu0
    %v974 = vpop.f32.mrb[0].mxu0
    %v975 = vadd.f32 %v888, %v974
    %v976 = vpop.f32.mrb[0].mxu0
    %977 = vmatprep.mubr.bf16.mxu0 0
    %978 = vmatmul.mubr.bf16.gmra.mrb[0].mxu0 %v878
    %v979 = vpop.f32.mrb[0].mxu0
    %v980 = vadd.f32 %v888, %v979
    %v981 = vpop.f32.mrb[0].mxu0
    %v982 = vpop.f32.mrb[0].mxu0
    %v983 = vadd.f32 %v888, %v982
    %v984 = vpop.f32.mrb[0].mxu0
    %985 = vmatprep.mubr.bf16.mxu0 0
    %986 = vmatmul.mubr.bf16.gmra.mrb[0].mxu0 %v879
    %v987 = vpop.f32.mrb[0].mxu0
    %v988 = vadd.f32 %v888, %v987
    %v989 = vpop.f32.mrb[0].mxu0
    %v990 = vpop.f32.mrb[0].mxu0
    %v991 = vpop.f32.mrb[0].mxu0
    %992 = vmatprep.mubr.bf16.mxu0 0
    %993 = vmatmul.mubr.bf16.gmra.mrb[0].mxu0 %v880
    %v994 = vpop.f32.mrb[0].mxu0
    %v995 = vpop.f32.mrb[0].mxu0
    %v996 = vpop.f32.mrb[0].mxu0
    %v997 = vpop.f32.mrb[0].mxu0
    %998 = vmatprep.mubr.bf16.mxu0 0
    %999 = vmatmul.mubr.bf16.gmra.mrb[0].mxu0 %v881
    %v1000 = vpop.f32.mrb[0].mxu0
    %v1001 = vpop.f32.mrb[0].mxu0
    %v1002 = vpop.f32.mrb[0].mxu0
    %v1003 = vpop.f32.mrb[0].mxu0
    %1004 = vmatprep.mubr.bf16.mxu0 0
    %1005 = vmatmul.mubr.bf16.gmra.mrb[0].mxu0 %v882
    %v1006 = vpop.f32.mrb[0].mxu0
    %v1007 = vpop.f32.mrb[0].mxu0
    %v1008 = vpop.f32.mrb[0].mxu0
    %v1009 = vpop.f32.mrb[0].mxu0
    %1010 = vmatprep.mubr.bf16.mxu0 0
    %1011 = vmatmul.mubr.bf16.gmra.mrb[0].mxu0 %v883
    %v1012 = vpop.f32.mrb[0].mxu0
    %v1013 = vpop.f32.mrb[0].mxu0
    %v1014 = vpop.f32.mrb[0].mxu0
    %v1015 = vpop.f32.mrb[0].mxu0
    %1016 = vmatprep.mubr.bf16.mxu0 0
    %1017 = vmatmul.mubr.bf16.gmra.mrb[0].mxu0 %v884
    %v1018 = vpop.f32.mrb[0].mxu0
    %v1019 = vpop.f32.mrb[0].mxu0
    %v1020 = vpop.f32.mrb[0].mxu0
    %v1021 = vpop.f32.mrb[0].mxu0
    %1022 = vdwg.mxu0
    %1023 = vst [vmem:[#allocation5] sm:$0xff] %v972
    %1024 = vst [vmem:[#allocation5 + $0x8] sm:$0xff] %v975
    %1025 = vst [vmem:[#allocation5 + $0x10] sm:$0xff] %v980
    %1026 = vst [vmem:[#allocation5 + $0x18] sm:$0xff] %v983
    %1027 = vst [vmem:[#allocation5 + $0x20] sm:$0xff] %v988
    // Predicated region
    $region10: #{gcn_forward_packed.1} parent=1 // pred_check
      _
    $region11: #{gcn_forward_packed.1} parent=1 // pred_check_branch
      %1029 = sbr.rel (0) target = $region13
    $region12: #{gcn_forward_packed.1} parent=1 // pred_region
      %s1031 = ssub.s32 640, 640
      %1032 = vsyncadd [#allocation4], %s1031
      %s1033 = sshll.u32 [#allocation5], 4
      %s1034 = int_to_ptr.vmem [resolvable:$true] %s1033
      %1039 = dma.vmem_to_hbm [thread:$0]  %s1034, 640, %s1, [#allocation4], 128, 128, 8
    $region13: #{gcn_forward_packed.1} parent=1 // pred_fallthru
      _
    // Predicated region
    $region14: #{gcn_forward_packed.1} parent=1 // pred_check
      _
    $region15: #{gcn_forward_packed.1} parent=1 // pred_check_branch
      %1041 = sbr.rel (0) target = $region17
    $region16: #{gcn_forward_packed.1} parent=1 // pred_region
      %1042 = dma.done [#allocation4], 640
    $region17: #{gcn_forward_packed.1} parent=1 // pred_fallthru
      _
    %1043 = vsyncpa [#allocation3], 1
    %1044 = vsyncpa [#allocation4], 1

</llo_original>
